<compile_context>
chip_gen: v7x
topology: tpu7x:2x2x1
jax: 0.10.0
libtpu: 0.0.40
codegen_flags: <defaults>
</compile_context>

<pallas_src>
import functools

import jax
import jax.numpy as jnp
from jax.experimental import pallas as pl
from jax.experimental.pallas import tpu as pltpu


# ----------------------------------------------------------------------------
# Single-step kernel (LinearSSMCell.forward)
# ----------------------------------------------------------------------------
def _ssm_cell_kernel(h_ref, n_ref, wg_ref, wm_ref, b_ref, newh_ref, x_ref):
    """One SSM step.

    h_ref   : (B, L*H)  lagged hidden window, lag-major along lanes
    n_ref   : (B, H)    noise eps_t
    wg_ref  : (L*H, H)  GroupLinearLayer weights flattened over (lag, din)
    wm_ref  : (H, O)    mix.weight.T
    b_ref   : (1, O)    mix.bias
    newh_ref: (B, L*H)  shifted window [y_t, old lags 0..L-2]   (aliases h)
    x_ref   : (B, O)    x_t = A y_t + b
    """
    # Read the whole window before any write.  Safe with the HBM alias because
    # the aliased input and output still occupy SEPARATE VMEM blocks; do not
    # switch these specs to memory_space=pl.ANY without revisiting this.
    h = h_ref[...]
    lh = h.shape[1]
    # y_t = sum_p B_p y_{t-p} + eps_t  -- one MXU pass over the flattened lags
    y = jnp.dot(h, wg_ref[...], preferred_element_type=jnp.float32) + n_ref[...]
    hdim = y.shape[1]
    # x_t = A y_t + b
    x = jnp.dot(y, wm_ref[...], preferred_element_type=jnp.float32) + b_ref[...]
    x_ref[...] = x.astype(x_ref.dtype)
    # Hidden-state shift in-register: one lane-dense (B, L*H) store.
    newh_ref[...] = jnp.concatenate(
        [y.astype(newh_ref.dtype), h[:, : lh - hdim]], axis=-1)


@jax.jit
def linear_ssm_cell(hiddens, noise, w_group, w_mix_t, b_mix):
    """Pallas-backed forward of LinearSSMCell (single step).

    hiddens : (B, L, H)
    noise   : (B, 1, H)
    w_group : (L, H, H)   GroupLinearLayer.w
    w_mix_t : (H, O)      mix.weight.T
    b_mix   : (O,)        mix.bias
    returns (x, new_hiddens) with x: (B, 1, O), new_hiddens: (B, L, H)

    NOTE: this path pays a full kernel launch + HBM round trip per step; for
    sequences, use linear_ssm_scan instead (perf review item).
    """
    B, L, H = hiddens.shape
    O = w_mix_t.shape[1]

    h_flat = hiddens.reshape(B, L * H)     # contiguous reshape, no data movement
    w_flat = w_group.reshape(L * H, H)
    n_flat = noise.reshape(B, H)
    b2d = b_mix.reshape(1, O)

    vmem = pl.BlockSpec(memory_space=pltpu.MemorySpace.VMEM)
    new_h_flat, x = pl.pallas_call(
        _ssm_cell_kernel,
        out_shape=(
            jax.ShapeDtypeStruct((B, L * H), hiddens.dtype),   # shifted window
            jax.ShapeDtypeStruct((B, O), hiddens.dtype),       # x_t
        ),
        # No grid: single invocation, whole (tiny) operands live in VMEM.
        in_specs=[vmem] * 5,
        out_specs=(vmem, vmem),
        # New window overwrites the old one's HBM buffer in place.
        input_output_aliases={0: 0},
    )(h_flat, n_flat, w_flat, w_mix_t, b2d)

    return x[:, None, :], new_h_flat.reshape(B, L, H)


# ----------------------------------------------------------------------------
# Fused, time-chunked T-step scan kernel
# ----------------------------------------------------------------------------
def _make_ssm_chunk_kernel(tc, L, H, O):
    """Build the per-chunk kernel.  tc = steps per grid iteration, tc % L == 0."""
    del O  # only used by the wrapper for shapes

    def kernel(h0_ref, n_ref, wrot_ref, wmbd_ref, b_ref, x_ref, hT_ref, hstate):
        """One chunk of tc SSM steps.

        h0_ref  : (B, L*H)        initial window (resident; read on chunk 0 only)
        n_ref   : (1, B, tc*H)    lane-packed noise for this chunk (streamed)
        wrot_ref: (L, L*H, H)     L pre-rotated recurrence weights (resident)
        wmbd_ref: (tc*H, tc*O)    block-diagonal mix weight (resident)
        b_ref   : (1, tc*O)       tiled mix bias (resident)
        x_ref   : (1, B, tc*O)    lane-packed observations for this chunk (streamed)
        hT_ref  : (B, L*H)        final window (flushed once, after last chunk;
                                   aliases h0's HBM buffer)
        hstate  : (B, L*H) f32    VMEM scratch: ring-buffered hidden window
        """
        c = pl.program_id(0)

        @pl.when(c == 0)
        def _init():
            hstate[...] = h0_ref[...].astype(jnp.float32)

        # Hoisted per-chunk loads, reused by every unrolled step below.  The L
        # rotated recurrence weights are deliberately NOT hoisted into values:
        # 4 x (128, 32) f32 would occupy the whole vreg file; the MXU reads
        # them straight from the resident VMEM block instead.
        n_slab = n_ref[0]                                   # (B, tc*H)

        ys = []
        # Fully unrolled inner loop: tc steps per grid iteration (static trip
        # count).  Because tc % L == 0, the absolute step t = c*tc + s has
        # t % L == s % L, so every ring index below is a static Python int.
        for s in range(tc):
            rot = s % L                      # which pre-rotated weight applies
            slot = (L - 1 - s) % L           # ring slot holding the oldest lag
            y = jnp.dot(hstate[...], wrot_ref[rot],
                        preferred_element_type=jnp.float32)
            y = y + n_slab[:, s * H:(s + 1) * H]
            ys.append(y)
            # Ring update: only y_t's 32-lane slot is written; no 128-lane
            # shift of the window per step (replaces the old concat-shift).
            hstate[:, slot * H:(slot + 1) * H] = y

        # Batched output projection for the whole chunk: one matmul against a
        # block-diagonal mix weight maps the packed y-slab straight to the
        # packed x-slab, so the store below is a single unmasked, lane-dense
        # (B, tc*O) store (tc*O is a multiple of 128).
        y_packed = jnp.concatenate(ys, axis=-1)             # (B, tc*H)
        x_packed = jnp.dot(y_packed, wmbd_ref[...],
                           preferred_element_type=jnp.float32) + b_ref[...]
        x_ref[0] = x_packed.astype(x_ref.dtype)

        # Final window writeback.  Since tc % L == 0 (hence T % L == 0), the
        # ring layout coincides with the canonical lag layout after the last
        # step, so this is a straight copy.  The constant-index output block
        # is flushed to HBM exactly once, after the last grid step (revisit
        # semantics) — that is also what makes the h0 <-> hT alias safe.
        @pl.when(c == pl.num_programs(0) - 1)
        def _finalize():
            hT_ref[...] = hstate[...].astype(hT_ref.dtype)

    return kernel


@functools.partial(jax.jit, static_argnames=("tc_steps",))
def linear_ssm_scan(hiddens, noise_seq, w_group, w_mix_t, b_mix, *, tc_steps=8):
    """Run T LinearSSMCell steps inside ONE kernel, tc_steps per grid iteration.

    hiddens   : (B, L, H)   initial window
    noise_seq : (T, B, H)   eps_t for t = 0..T-1
    returns (xs, final_hiddens) with xs: (T, B, O), final_hiddens: (B, L, H)

    Requires tc_steps % L == 0 and T % tc_steps == 0 (so all ring-buffer
    indices are static inside the unrolled chunk loop).
    """
    B, L, H = hiddens.shape
    T = noise_seq.shape[0]
    O = w_mix_t.shape[1]
    tc = tc_steps
    if tc % L != 0 or T % tc != 0:
        raise ValueError(
            f"tc_steps={tc} must be a multiple of time_lags={L} and divide T={T}")
    n_chunks = T // tc
    LH = L * H   # keep at 128 (or a multiple) — one full MXU contraction on v5e

    h_flat = hiddens.reshape(B, LH)
    # L pre-rotated copies of the flattened recurrence weight: w_rot[r] row-block
    # j is w_group[(j + r) % L], so step t uses w_rot[t % L] against the ring.
    w_rot = jnp.stack(
        [jnp.roll(w_group, -r, axis=0).reshape(LH, H) for r in range(L)], axis=0)
    # Block-diagonal mix weight + tiled bias: projects the packed (B, tc*H) slab
    # of per-step y's directly into the packed (B, tc*O) slab of per-step x's.
    wm_bd = jnp.kron(jnp.eye(tc, dtype=w_mix_t.dtype), w_mix_t)   # (tc*H, tc*O)
    b_tiled = jnp.tile(b_mix, tc).reshape(1, tc * O)
    # Lane-pack the noise: chunk c, lanes [s*H,(s+1)*H) hold eps_{c*tc+s}.
    # (Wrapper-side layout plumbing so the in-kernel DMA/loads are lane-dense.)
    n_packed = (noise_seq.reshape(n_chunks, tc, B, H)
                .transpose(0, 2, 1, 3).reshape(n_chunks, B, tc * H))

    kernel = _make_ssm_chunk_kernel(tc, L, H, O)
    xs_packed, hT = pl.pallas_call(
        kernel,
        out_shape=(
            jax.ShapeDtypeStruct((n_chunks, B, tc * O), hiddens.dtype),
            jax.ShapeDtypeStruct((B, LH), hiddens.dtype),
        ),
        grid=(n_chunks,),
        in_specs=[
            pl.BlockSpec((B, LH), lambda c: (0, 0)),            # resident h0
            pl.BlockSpec((1, B, tc * H), lambda c: (c, 0, 0)),  # streamed noise
            pl.BlockSpec((L, LH, H), lambda c: (0, 0, 0)),      # resident w_rot
            pl.BlockSpec((tc * H, tc * O), lambda c: (0, 0)),   # resident mix (blkdiag)
            pl.BlockSpec((1, tc * O), lambda c: (0, 0)),        # resident bias
        ],
        out_specs=(
            pl.BlockSpec((1, B, tc * O), lambda c: (c, 0, 0)),  # streamed x
            pl.BlockSpec((B, LH), lambda c: (0, 0)),            # final window
        ),
        scratch_shapes=[pltpu.VMEM((B, LH), jnp.float32)],
        # Final window reuses the initial window's HBM buffer (free win; the
        # input block is only read on chunk 0, the output only flushed at end).
        input_output_aliases={0: 1},
        compiler_params=pltpu.CompilerParams(
            dimension_semantics=("arbitrary",)),                # sequential recurrence
    )(h_flat, n_packed, w_rot, wm_bd, b_tiled)

    # Unpack the lane-packed observations back to (T, B, O).
    xs = (xs_packed.reshape(n_chunks, B, tc, O)
          .transpose(0, 2, 1, 3).reshape(T, B, O))
    return xs, hT.reshape(B, L, H)


# ----------------------------------------------------------------------------
# Pure-JAX references
# ----------------------------------------------------------------------------
def _cell_reference(hiddens, noise, w_group, w_mix_t, b_mix):
    mu = jnp.einsum("blh,lhk->bk", hiddens, w_group)
    y = mu + noise[:, 0, :]
    x = y @ w_mix_t + b_mix
    new_hiddens = jnp.concatenate([y[:, None, :], hiddens[:, :-1, :]], axis=1)
    return x[:, None, :], new_hiddens


def _scan_reference(hiddens, noise_seq, w_group, w_mix_t, b_mix):
    xs = []
    h = hiddens
    for t in range(noise_seq.shape[0]):
        x, h = _cell_reference(h, noise_seq[t][:, None, :], w_group, w_mix_t, b_mix)
        xs.append(x[:, 0, :])
    return jnp.stack(xs, axis=0), h


if __name__ == "__main__":
    # LinearSSMCell(hidden_size=32, time_lags=4, output_size=32), batch=8,
    # sequence length 64 scanned in chunks of 8 steps per grid iteration.
    B, L, H, O = 8, 4, 32, 32
    T, TC = 64, 8
    key = jax.random.PRNGKey(0)
    k_h, k_n, k_ns, k_w, k_mw, k_mb = jax.random.split(key, 6)

    hiddens = jax.random.normal(k_h, (B, L, H), dtype=jnp.float32)
    noise = jax.random.normal(k_n, (B, 1, H), dtype=jnp.float32)
    noise_seq = jax.random.normal(k_ns, (T, B, H), dtype=jnp.float32)

    # Deterministic parameter init (shapes match the PyTorch module __init__):
    #   GroupLinearLayer.w : 0.01 * randn(L, H, H)
    #   mix = nn.Linear(H, O): weight (O, H), bias (O,) ~ U(-1/sqrt(H), 1/sqrt(H))
    w_group = 0.01 * jax.random.normal(k_w, (L, H, H), dtype=jnp.float32)
    bound = 1.0 / (H ** 0.5)
    w_mix = jax.random.uniform(k_mw, (O, H), jnp.float32, -bound, bound)
    b_mix = jax.random.uniform(k_mb, (O,), jnp.float32, -bound, bound)
    w_mix_t = w_mix.T  # (H, O)

    # --- single step (faithful to LinearSSMCell.forward) ---
    x_out, h_out = linear_ssm_cell(hiddens, noise, w_group, w_mix_t, b_mix)
    jax.block_until_ready((x_out, h_out))
    x_exp, h_exp = _cell_reference(hiddens, noise, w_group, w_mix_t, b_mix)
    assert x_out.shape == (B, 1, O) and h_out.shape == (B, L, H)
    assert jnp.allclose(x_out, x_exp, atol=1e-5, rtol=1e-5)
    assert jnp.allclose(h_out, h_exp, atol=1e-5, rtol=1e-5)

    # --- fused, chunked T-step scan (== looping the cell T times) ---
    xs_out, hT_out = linear_ssm_scan(hiddens, noise_seq, w_group, w_mix_t, b_mix,
                                     tc_steps=TC)
    jax.block_until_ready((xs_out, hT_out))
    xs_exp, hT_exp = _scan_reference(hiddens, noise_seq, w_group, w_mix_t, b_mix)
    assert xs_out.shape == (T, B, O) and hT_out.shape == (B, L, H)
    assert jnp.allclose(xs_out, xs_exp, atol=1e-4, rtol=1e-4)
    assert jnp.allclose(hT_out, hT_exp, atol=1e-4, rtol=1e-4)

    print("KERNEL_OK")
</pallas_src>

<mosaic_0001>
module attributes {stable_mosaic.version = 11 : i64} {
  func.func @_ssm_cell_kernel(%arg0: memref<8x128xf32, #tpu.memory_space<vmem>>, %arg1: memref<8x32xf32, #tpu.memory_space<vmem>>, %arg2: memref<128x32xf32, #tpu.memory_space<vmem>>, %arg3: memref<32x32xf32, #tpu.memory_space<vmem>>, %arg4: memref<1x32xf32, #tpu.memory_space<vmem>>, %arg5: memref<8x128xf32, #tpu.memory_space<vmem>>, %arg6: memref<8x32xf32, #tpu.memory_space<vmem>>) attributes {dimension_semantics = [], scalar_prefetch = 0 : i64, scratch_operands = 0 : i64, tpu.core_type = #tpu.core_type<tc>} {
    %c0 = arith.constant 0 : index
    %c0_0 = arith.constant 0 : index
    %0 = vector.load %arg0[%c0, %c0_0] : memref<8x128xf32, #tpu.memory_space<vmem>>, vector<8x128xf32>
    %c0_1 = arith.constant 0 : index
    %c0_2 = arith.constant 0 : index
    %1 = vector.load %arg2[%c0_1, %c0_2] : memref<128x32xf32, #tpu.memory_space<vmem>>, vector<128x32xf32>
    %cst = arith.constant dense<0.000000e+00> : vector<8x32xf32>
    %2 = tpu.matmul %0, %1, %cst {dimension_numbers = #tpu.dot_dimension_numbers<[1], [0], [0], [1], [0, 0, 1, 1], [], []>} : vector<8x128xf32>, vector<128x32xf32>, vector<8x32xf32> -> vector<8x32xf32>
    %c0_3 = arith.constant 0 : index
    %c0_4 = arith.constant 0 : index
    %3 = vector.load %arg1[%c0_3, %c0_4] : memref<8x32xf32, #tpu.memory_space<vmem>>, vector<8x32xf32>
    %4 = arith.addf %2, %3 : vector<8x32xf32>
    %c0_5 = arith.constant 0 : index
    %c0_6 = arith.constant 0 : index
    %5 = vector.load %arg3[%c0_5, %c0_6] : memref<32x32xf32, #tpu.memory_space<vmem>>, vector<32x32xf32>
    %cst_7 = arith.constant dense<0.000000e+00> : vector<8x32xf32>
    %6 = tpu.matmul %4, %5, %cst_7 {dimension_numbers = #tpu.dot_dimension_numbers<[1], [0], [0], [1], [0, 0, 1, 1], [], []>} : vector<8x32xf32>, vector<32x32xf32>, vector<8x32xf32> -> vector<8x32xf32>
    %c0_8 = arith.constant 0 : index
    %c0_9 = arith.constant 0 : index
    %7 = vector.load %arg4[%c0_8, %c0_9] : memref<1x32xf32, #tpu.memory_space<vmem>>, vector<1x32xf32>
    %8 = vector.broadcast %7 : vector<1x32xf32> to vector<8x32xf32>
    %9 = arith.addf %6, %8 : vector<8x32xf32>
    %c0_10 = arith.constant 0 : index
    %c0_11 = arith.constant 0 : index
    %10 = vector.load %arg6[%c0_10, %c0_11] : memref<8x32xf32, #tpu.memory_space<vmem>>, vector<8x32xf32>
    tpu.vector_store %arg6[%c0_10, %c0_11], %9 {strides = array<i32>} : memref<8x32xf32, #tpu.memory_space<vmem>>, vector<8x32xf32>,
    %11 = vector.extract_strided_slice %0 {offsets = [0, 0], sizes = [8, 96], strides = [1, 1]} : vector<8x128xf32> to vector<8x96xf32>
    %12 = tpu.concatenate %4, %11 in 1 : vector<8x32xf32>, vector<8x96xf32> -> vector<8x128xf32>
    %c0_12 = arith.constant 0 : index
    %c0_13 = arith.constant 0 : index
    %13 = vector.load %arg5[%c0_12, %c0_13] : memref<8x128xf32, #tpu.memory_space<vmem>>, vector<8x128xf32>
    tpu.vector_store %arg5[%c0_12, %c0_13], %12 {strides = array<i32>} : memref<8x128xf32, #tpu.memory_space<vmem>>, vector<8x128xf32>,
    return
  }
}

</mosaic_0001>

<llo_original>
// kernel: linear_ssm_cell.1
$region0: #{linear_ssm_cell.1}
  #allocation0 [shape = 'u32[]', space=smem, size = 0x4, offset = 0x4, fixed_abs, tag = 'smem constant byte address 0x4 - core index']
  #allocation1 [shape = 'u32[144,128]{1,0:T(1,128)}', space=vmem, size = 0x12000, scoped, tag = 'internal scratch']
  %s0 = inlined_call_operand.vmem [shape: f32[8,128], index: 0, kind: input, shape index: {}, may-alias: {0,5}]
  %s1 = inlined_call_operand.vmem [shape: f32[8,32], index: 1, kind: input, shape index: {}]
  %s2 = inlined_call_operand.hbm [shape: f32[128,32], index: 2, kind: input, shape index: {}]
  %s3 = inlined_call_operand.vmem [shape: f32[32,32], index: 3, kind: input, shape index: {}]
  %s4 = inlined_call_operand.vmem [shape: f32[1,32], index: 4, kind: input, shape index: {}]
  %s5 = inlined_call_operand.vmem [shape: f32[8,128], index: 5, kind: output, shape index: {0}, may-alias: {0,5}]
  %s6 = inlined_call_operand.hbm [shape: f32[8,32], index: 6, kind: output, shape index: {1}]
  %7 = xla_tuple %s5, %s6
  %s8 = sld [smem:[#allocation0]]
  $region42: #{linear_ssm_cell.1} parent=0
    _
  %s10 = ssub.s32 1, %s8
  %s11 = scalar_select 0, %s10, %s8
  $region1: #{linear_ssm_cell.1} parent=0
    #allocation2 [shape = 'u8[65536]{0}', space=vmem, size = 0x10000, scoped, tag = 'input window, operand 2, single buffered']
    #allocation3 [shape = 's32[1]{0}', space=sflag, size = 0x4, scoped, tag = 'scoped memory for linear_ssm_cell.1']
    #allocation4 [shape = 's32[1]{0}', space=sflag, size = 0x4, scoped, tag = 'scoped memory for linear_ssm_cell.1']
    #allocation5 [shape = 'u8[4096]{0}', space=vmem, size = 0x1000, scoped, tag = 'output window, operand 1, single buffered']
    %12 = vsyncpa [#allocation3], 0
    %13 = vsyncpa [#allocation4], 0
    // Predicated region
    $region2: #{linear_ssm_cell.1} parent=1 // pred_check
      _
    $region3: #{linear_ssm_cell.1} parent=1 // pred_check_branch
      %15 = sbr.rel (0) target = $region5
    $region4: #{linear_ssm_cell.1} parent=1 // pred_region
      _
    $region5: #{linear_ssm_cell.1} parent=1 // pred_fallthru
      _
    // Predicated region
    $region6: #{linear_ssm_cell.1} parent=1 // pred_check
      _
    $region7: #{linear_ssm_cell.1} parent=1 // pred_check_branch
      %17 = sbr.rel (0) target = $region9
    $region8: #{linear_ssm_cell.1} parent=1 // pred_region
      _
    $region9: #{linear_ssm_cell.1} parent=1 // pred_fallthru
      _
    // Predicated region
    $region10: #{linear_ssm_cell.1} parent=1 // pred_check
      _
    $region11: #{linear_ssm_cell.1} parent=1 // pred_check_branch
      %19 = sbr.rel (0) target = $region13
    $region12: #{linear_ssm_cell.1} parent=1 // pred_region
      %s21 = ssub.s32 2048, 2048
      %22 = vsyncadd [#allocation3], %s21
      %s23 = sshll.u32 [#allocation2], 4
      %s24 = int_to_ptr.vmem [resolvable:$true] %s23
      %29 = dma.hbm_to_vmem [thread:$0]  %s2, 2048, %s24, [#allocation3], 128, 128, 8
    $region13: #{linear_ssm_cell.1} parent=1 // pred_fallthru
      _
    // Predicated region
    $region14: #{linear_ssm_cell.1} parent=1 // pred_check
      _
    $region15: #{linear_ssm_cell.1} parent=1 // pred_check_branch
      %31 = sbr.rel (0) target = $region17
    $region16: #{linear_ssm_cell.1} parent=1 // pred_region
      _
    $region17: #{linear_ssm_cell.1} parent=1 // pred_fallthru
      _
    // Predicated region
    $region18: #{linear_ssm_cell.1} parent=1 // pred_check
      _
    $region19: #{linear_ssm_cell.1} parent=1 // pred_check_branch
      %33 = sbr.rel (0) target = $region21
    $region20: #{linear_ssm_cell.1} parent=1 // pred_region
      _
    $region21: #{linear_ssm_cell.1} parent=1 // pred_fallthru
      _
    // Predicated region
    $region22: #{linear_ssm_cell.1} parent=1 // pred_check
      _
    $region23: #{linear_ssm_cell.1} parent=1 // pred_check_branch
      %35 = sbr.rel (0) target = $region25
    $region24: #{linear_ssm_cell.1} parent=1 // pred_region
      %36 = dma.done [#allocation3], 2048
    $region25: #{linear_ssm_cell.1} parent=1 // pred_fallthru
      _
    %v37 = vld [vmem:[%s0] sm:$0xff]
    %v38 = vld [vmem:[#allocation2] sm:$0xff]
    %v39 = vld [vmem:[#allocation2 + $0x8] sm:$0xff]
    %v40 = vld [vmem:[#allocation2 + $0x10] sm:$0xff]
    %v41 = vld [vmem:[#allocation2 + $0x18] sm:$0xff]
    %v42 = vld [vmem:[#allocation2 + $0x20] sm:$0xff]
    %v43 = vld [vmem:[#allocation2 + $0x28] sm:$0xff]
    %v44 = vld [vmem:[#allocation2 + $0x30] sm:$0xff]
    %v45 = vld [vmem:[#allocation2 + $0x38] sm:$0xff]
    %v46 = vld [vmem:[#allocation2 + $0x40] sm:$0xff]
    %v47 = vld [vmem:[#allocation2 + $0x48] sm:$0xff]
    %v48 = vld [vmem:[#allocation2 + $0x50] sm:$0xff]
    %v49 = vld [vmem:[#allocation2 + $0x58] sm:$0xff]
    %v50 = vld [vmem:[#allocation2 + $0x60] sm:$0xff]
    %v51 = vld [vmem:[#allocation2 + $0x68] sm:$0xff]
    %v52 = vld [vmem:[#allocation2 + $0x70] sm:$0xff]
    %v53 = vld [vmem:[#allocation2 + $0x78] sm:$0xff]
    %v54 = vld [vmem:[%s1] sm:$0xff]
    %55 = vmatprep.subr.mxu0 0.0
    %56 = vmatpush1.msra.mxu0 %v38
    %57 = vmatprep.subr.mxu0 0.0
    %58 = vmatpush1.msra.mxu0 %v39
    %59 = vmatprep.subr.mxu0 0.0
    %60 = vmatpush1.msra.mxu0 %v40
    %61 = vmatprep.subr.mxu0 0.0
    %62 = vmatpush1.msra.mxu0 %v41
    %63 = vmatprep.subr.mxu0 0.0
    %64 = vmatpush1.msra.mxu0 %v42
    %65 = vmatprep.subr.mxu0 0.0
    %66 = vmatpush1.msra.mxu0 %v43
    %67 = vmatprep.subr.mxu0 0.0
    %68 = vmatpush1.msra.mxu0 %v44
    %69 = vmatprep.subr.mxu0 0.0
    %70 = vmatpush1.msra.mxu0 %v45
    %71 = vmatprep.subr.mxu0 0.0
    %72 = vmatpush1.msra.mxu0 %v46
    %73 = vmatprep.subr.mxu0 0.0
    %74 = vmatpush1.msra.mxu0 %v47
    %75 = vmatprep.subr.mxu0 0.0
    %76 = vmatpush1.msra.mxu0 %v48
    %77 = vmatprep.subr.mxu0 0.0
    %78 = vmatpush1.msra.mxu0 %v49
    %79 = vmatprep.subr.mxu0 0.0
    %80 = vmatpush1.msra.mxu0 %v50
    %81 = vmatprep.subr.mxu0 0.0
    %82 = vmatpush1.msra.mxu0 %v51
    %83 = vmatprep.subr.mxu0 0.0
    %84 = vmatpush1.msra.mxu0 %v52
    %85 = vmatprep.subr.mxu0 0.0
    %86 = vmatpush1.msra.mxu0 %v53
    %87 = vmatprep.subr.mxu0 0.0
    %88 = vmatpush1.msra.mxu0 0.0
    %89 = vmatprep.subr.mxu0 0.0
    %90 = vmatpush1.msra.mxu0 0.0
    %91 = vmatprep.subr.mxu0 0.0
    %92 = vmatpush1.msra.mxu0 0.0
    %93 = vmatprep.subr.mxu0 0.0
    %94 = vmatpush1.msra.mxu0 0.0
    %95 = vmatprep.subr.mxu0 0.0
    %96 = vmatpush1.msra.mxu0 0.0
    %97 = vmatprep.subr.mxu0 0.0
    %98 = vmatpush1.msra.mxu0 0.0
    %99 = vmatprep.subr.mxu0 0.0
    %100 = vmatpush1.msra.mxu0 0.0
    %101 = vmatprep.subr.mxu0 0.0
    %102 = vmatpush1.msra.mxu0 0.0
    %103 = vmatprep.subr.mxu0 0.0
    %104 = vmatpush1.msra.mxu0 0.0
    %105 = vmatprep.subr.mxu0 0.0
    %106 = vmatpush1.msra.mxu0 0.0
    %107 = vmatprep.subr.mxu0 0.0
    %108 = vmatpush1.msra.mxu0 0.0
    %109 = vmatprep.subr.mxu0 0.0
    %110 = vmatpush1.msra.mxu0 0.0
    %111 = vmatprep.subr.mxu0 0.0
    %112 = vmatpush1.msra.mxu0 0.0
    %113 = vmatprep.subr.mxu0 0.0
    %114 = vmatpush1.msra.mxu0 0.0
    %115 = vmatprep.subr.mxu0 0.0
    %116 = vmatpush1.msra.mxu0 0.0
    %117 = vmatprep.subr.mxu0 0.0
    %118 = vmatpush1.msra.mxu0 0.0
    %119 = vmatprep.mubr.f32.mxu0 0.0
    %120 = vmatmul.mubr.f32.gmra.mrb[0].mxu0 %v37
    %v121 = vpop.f32.mrb[0].mxu0
    %v122 = vadd.f32 %v54, %v121
    %v123 = vpop.f32.mrb[0].mxu0
    %124 = vdwg.mxu0
    %v125 = vld [vmem:[%s3] sm:$0xff]
    %v126 = vld [vmem:[%s3 + $0x8] sm:$0xff]
    %v127 = vld [vmem:[%s3 + $0x10] sm:$0xff]
    %v128 = vld [vmem:[%s3 + $0x18] sm:$0xff]
    %v129 = vld [vmem:[%s4] sm:$0x1]
    %v131 = vlaneseq
    %v132 = vshrl.u32 %v131, 7
    %v133 = vsub.s32 0, %v132
    %v134 = vrot.slane %v129, %v133
    %vm136 = vcmask 261120
    %v138 = vsel %vm136, %v122, 0
    %140 = vmatprep.subr.mxu0 0.0
    %141 = vmatpush1.msra.mxu0 %v125
    %142 = vmatprep.subr.mxu0 0.0
    %143 = vmatpush1.msra.mxu0 %v126
    %144 = vmatprep.subr.mxu0 0.0
    %145 = vmatpush1.msra.mxu0 %v127
    %146 = vmatprep.subr.mxu0 0.0
    %147 = vmatpush1.msra.mxu0 %v128
    %148 = vmatprep.subr.mxu0 0.0
    %149 = vmatpush1.msra.mxu0 0.0
    %150 = vmatprep.subr.mxu0 0.0
    %151 = vmatpush1.msra.mxu0 0.0
    %152 = vmatprep.subr.mxu0 0.0
    %153 = vmatpush1.msra.mxu0 0.0
    %154 = vmatprep.subr.mxu0 0.0
    %155 = vmatpush1.msra.mxu0 0.0
    %156 = vmatprep.subr.mxu0 0.0
    %157 = vmatpush1.msra.mxu0 0.0
    %158 = vmatprep.subr.mxu0 0.0
    %159 = vmatpush1.msra.mxu0 0.0
    %160 = vmatprep.subr.mxu0 0.0
    %161 = vmatpush1.msra.mxu0 0.0
    %162 = vmatprep.subr.mxu0 0.0
    %163 = vmatpush1.msra.mxu0 0.0
    %164 = vmatprep.subr.mxu0 0.0
    %165 = vmatpush1.msra.mxu0 0.0
    %166 = vmatprep.subr.mxu0 0.0
    %167 = vmatpush1.msra.mxu0 0.0
    %168 = vmatprep.subr.mxu0 0.0
    %169 = vmatpush1.msra.mxu0 0.0
    %170 = vmatprep.subr.mxu0 0.0
    %171 = vmatpush1.msra.mxu0 0.0
    %172 = vmatprep.subr.mxu0 0.0
    %173 = vmatpush1.msra.mxu0 0.0
    %174 = vmatprep.subr.mxu0 0.0
    %175 = vmatpush1.msra.mxu0 0.0
    %176 = vmatprep.subr.mxu0 0.0
    %177 = vmatpush1.msra.mxu0 0.0
    %178 = vmatprep.subr.mxu0 0.0
    %179 = vmatpush1.msra.mxu0 0.0
    %180 = vmatprep.subr.mxu0 0.0
    %181 = vmatpush1.msra.mxu0 0.0
    %182 = vmatprep.subr.mxu0 0.0
    %183 = vmatpush1.msra.mxu0 0.0
    %184 = vmatprep.subr.mxu0 0.0
    %185 = vmatpush1.msra.mxu0 0.0
    %186 = vmatprep.subr.mxu0 0.0
    %187 = vmatpush1.msra.mxu0 0.0
    %188 = vmatprep.subr.mxu0 0.0
    %189 = vmatpush1.msra.mxu0 0.0
    %190 = vmatprep.subr.mxu0 0.0
    %191 = vmatpush1.msra.mxu0 0.0
    %192 = vmatprep.subr.mxu0 0.0
    %193 = vmatpush1.msra.mxu0 0.0
    %194 = vmatprep.subr.mxu0 0.0
    %195 = vmatpush1.msra.mxu0 0.0
    %196 = vmatprep.subr.mxu0 0.0
    %197 = vmatpush1.msra.mxu0 0.0
    %198 = vmatprep.subr.mxu0 0.0
    %199 = vmatpush1.msra.mxu0 0.0
    %200 = vmatprep.subr.mxu0 0.0
    %201 = vmatpush1.msra.mxu0 0.0
    %202 = vmatprep.subr.mxu0 0.0
    %203 = vmatpush1.msra.mxu0 0.0
    %204 = vmatprep.mubr.f32.mxu0 0.0
    %205 = vmatmul.mubr.f32.gmra.mrb[0].mxu0 %v138
    %v206 = vpop.f32.mrb[0].mxu0
    %v207 = vadd.f32 %v134, %v206
    %v208 = vpop.f32.mrb[0].mxu0
    %209 = vdwg.mxu0
    %210 = vst.msk [vmem:[#allocation5] sm:$0xff] %vm136, %v207
    %212 = vrot.lane.b32.xlu0 %v37, 32
    %v213 = vpop.permute.xlu0 %212
    %v215 = vsel %vm136, %v122, %v213
    %216 = vst [vmem:[%s5] sm:$0xff] %v215
    // Predicated region
    $region26: #{linear_ssm_cell.1} parent=1 // pred_check
      _
    $region27: #{linear_ssm_cell.1} parent=1 // pred_check_branch
      %218 = sbr.rel (0) target = $region29
    $region28: #{linear_ssm_cell.1} parent=1 // pred_region
      _
    $region29: #{linear_ssm_cell.1} parent=1 // pred_fallthru
      _
    // Predicated region
    $region30: #{linear_ssm_cell.1} parent=1 // pred_check
      _
    $region31: #{linear_ssm_cell.1} parent=1 // pred_check_branch
      %220 = sbr.rel (0) target = $region33
    $region32: #{linear_ssm_cell.1} parent=1 // pred_region
      %s222 = ssub.s32 128, 128
      %223 = vsyncadd [#allocation4], %s222
      %s225 = sshll.u32 [#allocation5], 4
      %s226 = int_to_ptr.vmem [resolvable:$true] %s225
      %228 = dma.vmem_to_hbm [thread:$0]  %s226, 128, %s6, [#allocation4]
    $region33: #{linear_ssm_cell.1} parent=1 // pred_fallthru
      _
    // Predicated region
    $region34: #{linear_ssm_cell.1} parent=1 // pred_check
      _
    $region35: #{linear_ssm_cell.1} parent=1 // pred_check_branch
      %230 = sbr.rel (0) target = $region37
    $region36: #{linear_ssm_cell.1} parent=1 // pred_region
      _
    $region37: #{linear_ssm_cell.1} parent=1 // pred_fallthru
      _
    // Predicated region
    $region38: #{linear_ssm_cell.1} parent=1 // pred_check
      _
    $region39: #{linear_ssm_cell.1} parent=1 // pred_check_branch
      %232 = sbr.rel (0) target = $region41
    $region40: #{linear_ssm_cell.1} parent=1 // pred_region
      %233 = dma.done [#allocation4], 128
    $region41: #{linear_ssm_cell.1} parent=1 // pred_fallthru
      _
    %234 = vsyncpa [#allocation3], 1
    %235 = vsyncpa [#allocation4], 1

</llo_original>
